<compile_context>
chip_gen: v6e
topology: v6e:2x2x1
jax: 0.10.0
libtpu: 0.0.40
codegen_flags: <defaults>
</compile_context>

<pallas_src>
import functools

import jax
import jax.numpy as jnp
from jax import lax
from jax.experimental import pallas as pl
from jax.experimental.pallas import tpu as pltpu

_EPS = 1e-8  # torch.nn.CosineSimilarity default eps


def _pairwise_cos_kernel(f_ref, o_ref, g_acc, *, nclass):
    """One grid step = one lane-aligned chunk of the (padded) feature dim.

    f_ref : (Bp, TD) chunk of the zero-padded feature matrix (VMEM)
    o_ref : (1, 1) scalar result (SMEM), written at the last step only
    g_acc : (Bp, Bp) f32 Gram accumulator (VMEM scratch, persists across grid)
    """
    k = pl.program_id(0)

    @pl.when(k == 0)
    def _init():
        g_acc[...] = jnp.zeros_like(g_acc)

    f = f_ref[...]
    # f @ f.T on the MXU: contract the lane (feature) axis of both operands,
    # accumulate in f32.  No explicit transpose needed.
    g_acc[...] += lax.dot_general(
        f, f, (((1,), (1,)), ((), ())), preferred_element_type=jnp.float32
    )

    @pl.when(k == pl.num_programs(0) - 1)
    def _finalize():
        g = g_acc[...]                                   # G_ij = <f_i, f_j>
        bp = g.shape[0]
        row = lax.broadcasted_iota(jnp.int32, (bp, bp), 0)
        col = lax.broadcasted_iota(jnp.int32, (bp, bp), 1)
        diag = row == col
        # diag(G) = ||f_i||^2 — recover squared norms from the accumulator.
        sq_col = jnp.sum(jnp.where(diag, g, 0.0), axis=1, keepdims=True)  # (Bp,1)
        sq_row = jnp.sum(jnp.where(diag, g, 0.0), axis=0, keepdims=True)  # (1,Bp)
        # cos_ij = G_ij * rsqrt(max(||f_i||^2 * ||f_j||^2, eps^2))
        denom_sq = jnp.maximum(sq_col * sq_row, _EPS * _EPS)
        cos = g * lax.rsqrt(denom_sq)
        # Only real (unpadded) off-diagonal pairs contribute.
        valid = (row != col) & (row < nclass) & (col < nclass)
        total = jnp.sum(jnp.where(valid, 1.0 + cos, 0.0))
        o_ref[0, 0] = total * (1.0 / (2.0 * nclass * (nclass - 1)))


def pairwise_cosine_distance(feature, *, lane_tile=2048):
    """Pallas TPU forward of PairwiseCosineDistance.

    feature: (nclass, D).  Returns scalar mean_{i != j} (1 + cos_ij) / 2.
    """
    nclass, d = feature.shape
    assert nclass >= 2, "PairwiseCosineDistance needs at least 2 classes"
    assert lane_tile % 128 == 0

    # Pad rows to a sublane multiple of 8 and D to a multiple of the lane tile.
    bp = -(-nclass // 8) * 8
    td = min(-(-d // 128) * 128, lane_tile)
    dp = -(-d // td) * td
    if bp == nclass and dp == d:
        fp = feature
    else:
        fp = jnp.zeros((bp, dp), feature.dtype).at[:nclass, :d].set(feature)

    n_chunks = dp // td
    kernel = functools.partial(_pairwise_cos_kernel, nclass=nclass)

    out = pl.pallas_call(
        kernel,
        out_shape=jax.ShapeDtypeStruct((1, 1), jnp.float32),
        grid=(n_chunks,),
        in_specs=[pl.BlockSpec((bp, td), lambda k: (0, k))],
        out_specs=pl.BlockSpec(memory_space=pltpu.MemorySpace.SMEM),
        scratch_shapes=[pltpu.VMEM((bp, bp), jnp.float32)],
        compiler_params=pltpu.CompilerParams(
            dimension_semantics=("arbitrary",)),
    )(fp)
    return out[0, 0]


def _reference(feature):
    """Direct JAX transcription of the PyTorch forward loop."""
    f = feature.astype(jnp.float32)
    nclass = f.shape[0]
    norms = jnp.linalg.norm(f, axis=1)
    per_cls = []
    for cls in range(nclass):
        others = jnp.concatenate([f[:cls], f[cls + 1:]], axis=0)
        o_norms = jnp.concatenate([norms[:cls], norms[cls + 1:]], axis=0)
        dots = others @ f[cls]
        cos = dots / jnp.maximum(norms[cls] * o_norms, _EPS)
        per_cls.append(jnp.mean(1.0 + cos) / 2.0)
    return jnp.mean(jnp.stack(per_cls))


if __name__ == "__main__":
    key = jax.random.PRNGKey(0)
    k1, k2 = jax.random.split(key)

    # Small shape consistent with the module: nclass=5 class features, hidden=32.
    f_small = jax.random.normal(k1, (5, 32), dtype=jnp.float32)
    out_small = pairwise_cosine_distance(f_small)
    jax.block_until_ready(out_small)
    ref_small = _reference(f_small)
    assert jnp.allclose(out_small, ref_small, atol=1e-5, rtol=1e-5), (
        out_small, ref_small)

    # Larger hidden dim with a small lane tile -> 3 grid steps, exercises the
    # init/accumulate/finalize (pl.when) path and double-buffered DMA.
    f_big = jax.random.normal(k2, (8, 384), dtype=jnp.float32)
    out_big = pairwise_cosine_distance(f_big, lane_tile=128)
    jax.block_until_ready(out_big)
    ref_big = _reference(f_big)
    assert jnp.allclose(out_big, ref_big, atol=1e-5, rtol=1e-5), (
        out_big, ref_big)

    print("KERNEL_OK")
</pallas_src>

<mosaic_0001>
module attributes {stable_mosaic.version = 11 : i64} {
  func.func @_pairwise_cos_kernel(%arg0: i32, %arg1: memref<8x128xf32, #tpu.memory_space<vmem>>, %arg2: memref<1x1xf32, #tpu.memory_space<smem>>, %arg3: memref<8x8xf32, #tpu.memory_space<vmem>>) attributes {dimension_semantics = [#tpu.dimension_semantics<arbitrary>], iteration_bounds = array<i64: 1>, scalar_prefetch = 0 : i64, scratch_operands = 1 : i64, tpu.core_type = #tpu.core_type<tc>, window_params = [{transform_indices = @transform_0, window_bounds = array<i64: 8, 128>}, {transform_indices = @transform_1, window_bounds = array<i64: 1, 1>}]} {
    %c0_i32 = arith.constant 0 : i32
    %0 = arith.cmpi eq, %arg0, %c0_i32 : i32
    %1 = arith.extui %0 : i1 to i32
    %c0_i32_0 = arith.constant 0 : i32
    %2 = arith.cmpi ne, %1, %c0_i32_0 : i32
    scf.if %2 {
      %cst_8 = arith.constant 0.000000e+00 : f32
      %11 = vector.broadcast %cst_8 : f32 to vector<8x8xf32>
      %c0_9 = arith.constant 0 : index
      %c0_10 = arith.constant 0 : index
      %12 = vector.load %arg3[%c0_9, %c0_10] : memref<8x8xf32, #tpu.memory_space<vmem>>, vector<8x8xf32>
      tpu.vector_store %arg3[%c0_9, %c0_10], %11 {strides = array<i32>} : memref<8x8xf32, #tpu.memory_space<vmem>>, vector<8x8xf32>,
    } else {
    }
    %c0 = arith.constant 0 : index
    %c0_1 = arith.constant 0 : index
    %3 = vector.load %arg1[%c0, %c0_1] : memref<8x128xf32, #tpu.memory_space<vmem>>, vector<8x128xf32>
    %c0_2 = arith.constant 0 : index
    %c0_3 = arith.constant 0 : index
    %4 = vector.load %arg3[%c0_2, %c0_3] : memref<8x8xf32, #tpu.memory_space<vmem>>, vector<8x8xf32>
    %cst = arith.constant dense<0.000000e+00> : vector<8x8xf32>
    %5 = tpu.matmul %3, %3, %cst {dimension_numbers = #tpu.dot_dimension_numbers<[1], [1], [0], [0], [0, 0, 1, 0], [], []>} : vector<8x128xf32>, vector<8x128xf32>, vector<8x8xf32> -> vector<8x8xf32>
    %6 = arith.addf %4, %5 : vector<8x8xf32>
    %c0_4 = arith.constant 0 : index
    %c0_5 = arith.constant 0 : index
    %7 = vector.load %arg3[%c0_4, %c0_5] : memref<8x8xf32, #tpu.memory_space<vmem>>, vector<8x8xf32>
    tpu.vector_store %arg3[%c0_4, %c0_5], %6 {strides = array<i32>} : memref<8x8xf32, #tpu.memory_space<vmem>>, vector<8x8xf32>,
    %c0_i32_6 = arith.constant 0 : i32
    %8 = arith.cmpi eq, %arg0, %c0_i32_6 : i32
    %9 = arith.extui %8 : i1 to i32
    %c0_i32_7 = arith.constant 0 : i32
    %10 = arith.cmpi ne, %9, %c0_i32_7 : i32
    scf.if %10 {
      %c0_8 = arith.constant 0 : index
      %c0_9 = arith.constant 0 : index
      %11 = vector.load %arg3[%c0_8, %c0_9] : memref<8x8xf32, #tpu.memory_space<vmem>>, vector<8x8xf32>
      %12 = tpu.iota {dimensions = array<i32: 0>} : vector<8x8xi32>
      %13 = tpu.iota {dimensions = array<i32: 1>} : vector<8x8xi32>
      %14 = arith.cmpi eq, %12, %13 : vector<8x8xi32>
      %cst_10 = arith.constant 0.000000e+00 : f32
      %15 = vector.broadcast %cst_10 : f32 to vector<8x8xf32>
      %16 = arith.select %14, %11, %15 : vector<8x8xi1>, vector<8x8xf32>
      %cst_11 = arith.constant dense<0.000000e+00> : vector<8xf32>
      %17 = vector.multi_reduction <add>, %16, %cst_11 [1] : vector<8x8xf32> to vector<8xf32>
      %18 = vector.shape_cast %17 : vector<8xf32> to vector<8x1xf32>
      %cst_12 = arith.constant 0.000000e+00 : f32
      %19 = vector.broadcast %cst_12 : f32 to vector<8x8xf32>
      %20 = arith.select %14, %11, %19 : vector<8x8xi1>, vector<8x8xf32>
      %cst_13 = arith.constant dense<0.000000e+00> : vector<8xf32>
      %21 = vector.multi_reduction <add>, %20, %cst_13 [0] : vector<8x8xf32> to vector<8xf32>
      %22 = vector.shape_cast %21 : vector<8xf32> to vector<1x8xf32>
      %23 = vector.broadcast %18 : vector<8x1xf32> to vector<8x8xf32>
      %24 = vector.broadcast %22 : vector<1x8xf32> to vector<8x8xf32>
      %25 = arith.mulf %23, %24 : vector<8x8xf32>
      %cst_14 = arith.constant 1.000000e-16 : f32
      %26 = vector.broadcast %cst_14 : f32 to vector<8x8xf32>
      %27 = arith.maximumf %25, %26 : vector<8x8xf32>
      %28 = math.rsqrt %27 : vector<8x8xf32>
      %29 = arith.mulf %11, %28 : vector<8x8xf32>
      %30 = arith.cmpi ne, %12, %13 : vector<8x8xi32>
      %c5_i32 = arith.constant 5 : i32
      %31 = vector.broadcast %c5_i32 : i32 to vector<8x8xi32>
      %32 = arith.cmpi slt, %12, %31 : vector<8x8xi32>
      %33 = arith.andi %30, %32 : vector<8x8xi1>
      %c5_i32_15 = arith.constant 5 : i32
      %34 = vector.broadcast %c5_i32_15 : i32 to vector<8x8xi32>
      %35 = arith.cmpi slt, %13, %34 : vector<8x8xi32>
      %36 = arith.andi %33, %35 : vector<8x8xi1>
      %cst_16 = arith.constant 1.000000e+00 : f32
      %37 = vector.broadcast %cst_16 : f32 to vector<8x8xf32>
      %38 = arith.addf %37, %29 : vector<8x8xf32>
      %cst_17 = arith.constant 0.000000e+00 : f32
      %39 = vector.broadcast %cst_17 : f32 to vector<8x8xf32>
      %40 = arith.select %36, %38, %39 : vector<8x8xi1>, vector<8x8xf32>
      %41 = vector.shape_cast %40 : vector<8x8xf32> to vector<1x8x8xf32>
      %cst_18 = arith.constant dense<0.000000e+00> : vector<1xf32>
      %42 = vector.multi_reduction <add>, %41, %cst_18 [1, 2] : vector<1x8x8xf32> to vector<1xf32>
      %43 = vector.shape_cast %42 : vector<1xf32> to vector<1x1x1xf32>
      %44 = vector.extract %43[0, 0, 0] : f32 from vector<1x1x1xf32>
      %cst_19 = arith.constant 2.500000e-02 : f32
      %45 = arith.mulf %44, %cst_19 : f32
      %c0_20 = arith.constant 0 : index
      %c0_21 = arith.constant 0 : index
      %46 = memref.load %arg2[%c0_20, %c0_21] : memref<1x1xf32, #tpu.memory_space<smem>>
      memref.store %45, %arg2[%c0_20, %c0_21] : memref<1x1xf32, #tpu.memory_space<smem>>
    } else {
    }
    return
  }
  func.func @transform_0(%arg0: i32) -> (i32, i32) {
    %c0_i32 = arith.constant 0 : i32
    %c0_i32_0 = arith.constant 0 : i32
    return %c0_i32, %arg0 : i32, i32
  }
  func.func @transform_1(%arg0: i32) -> (i32, i32) {
    %c0_i32 = arith.constant 0 : i32
    %c0_i32_0 = arith.constant 0 : i32
    %c0_i32_1 = arith.constant 0 : i32
    return %c0_i32, %c0_i32_0 : i32, i32
  }
}

</mosaic_0001>

<llo_original>
// kernel: tpu_custom_call.1
$region0: #{tpu_custom_call.1}
  #allocation0 [shape = 'u32[]', space=smem, size = 0x4, offset = 0x4, fixed_abs, tag = 'smem constant byte address 0x4 - core index']
  #allocation1 [shape = 'u32[144,128]{1,0:T(1,128)}', space=vmem, size = 0x12000, scoped, tag = 'internal scratch']
  #allocation2 [shape = 'f32[8,8]{1,0:T(8,128)}', space=vmem, size = 0x1000, scoped, tag = 'scratch operand']
  %s0 = inlined_call_operand.hbm [shape: f32[8,128], index: 0, kind: input, shape index: {}]
  %s1 = inlined_call_operand.hbm [shape: f32[1,1], index: 1, kind: output, shape index: {}]
  %s2 = sld [smem:[#allocation0]]
  $region26: #{tpu_custom_call.1} parent=0
    _
  %s4 = ssub.s32 1, %s2
  %s5 = scalar_select 0, %s4, %s2
  $region1: #{tpu_custom_call.1} parent=0
    #allocation3 [shape = 'u8[4096]{0}', space=vmem, size = 0x1000, scoped, tag = 'input window, operand 0, single buffered']
    #allocation4 [shape = 's32[1]{0}', space=sflag, size = 0x4, scoped, tag = 'scoped memory for tpu_custom_call.1']
    #allocation5 [shape = 's32[1]{0}', space=sflag, size = 0x4, scoped, tag = 'scoped memory for tpu_custom_call.1']
    #allocation6 [shape = 'u8[512]{0}', space=smem, size = 0x200, scoped, tag = 'output window, operand 0, single buffered']
    %6 = vsyncpa [#allocation4], 0
    %7 = vsyncpa [#allocation5], 0
    // Predicated region
    $region2: #{tpu_custom_call.1} parent=1 // pred_check
      _
    $region3: #{tpu_custom_call.1} parent=1 // pred_check_branch
      %9 = sbr.rel (0) target = $region5
    $region4: #{tpu_custom_call.1} parent=1 // pred_region
      %s11 = ssub.s32 128, 128
      %12 = vsyncadd [#allocation4], %s11
      %s14 = sshll.u32 [#allocation3], 4
      %s15 = int_to_ptr.vmem [resolvable:$true] %s14
      %17 = dma.hbm_to_vmem [thread:$0]  %s0, 128, %s15, [#allocation4]
    $region5: #{tpu_custom_call.1} parent=1 // pred_fallthru
      _
    // Predicated region
    $region6: #{tpu_custom_call.1} parent=1 // pred_check
      _
    $region7: #{tpu_custom_call.1} parent=1 // pred_check_branch
      %19 = sbr.rel (0) target = $region9
    $region8: #{tpu_custom_call.1} parent=1 // pred_region
      %20 = dma.done [#allocation4], 128
    $region9: #{tpu_custom_call.1} parent=1 // pred_fallthru
      _
    %p21 = scmp.eq.s32.totalorder 0, 0
    // Predicated region
    $region10: #{tpu_custom_call.1} parent=1 // pred_check
      %p22 = pneg %p21
    $region11: #{tpu_custom_call.1} parent=1 // pred_check_branch
      %24 = sbr.rel (%p22) target = $region13
    $region12: #{tpu_custom_call.1} parent=1 // pred_region
      %vm25 = vcmask 64512
      %26 = vst.msk [vmem:[#allocation2] sm:$0xff] %vm25, 0.0
    $region13: #{tpu_custom_call.1} parent=1 // pred_fallthru
      _
    %v27 = vld [vmem:[#allocation3] sm:$0xff]
    %v28 = vld [vmem:[#allocation2] sm:$0xff]
    %29 = vmatprep.subr.mxu0 0.0
    %30 = vmatpush1.xpose.msra.mxu0 0.0
    %31 = vmatprep.subr.mxu0 0.0
    %32 = vmatpush1.xpose.msra.mxu0 0.0
    %33 = vmatprep.subr.mxu0 0.0
    %34 = vmatpush1.xpose.msra.mxu0 0.0
    %35 = vmatprep.subr.mxu0 0.0
    %36 = vmatpush1.xpose.msra.mxu0 0.0
    %37 = vmatprep.subr.mxu0 0.0
    %38 = vmatpush1.xpose.msra.mxu0 0.0
    %39 = vmatprep.subr.mxu0 0.0
    %40 = vmatpush1.xpose.msra.mxu0 0.0
    %41 = vmatprep.subr.mxu0 0.0
    %42 = vmatpush1.xpose.msra.mxu0 0.0
    %43 = vmatprep.subr.mxu0 0.0
    %44 = vmatpush1.xpose.msra.mxu0 0.0
    %45 = vmatprep.subr.mxu0 0.0
    %46 = vmatpush1.xpose.msra.mxu0 0.0
    %47 = vmatprep.subr.mxu0 0.0
    %48 = vmatpush1.xpose.msra.mxu0 0.0
    %49 = vmatprep.subr.mxu0 0.0
    %50 = vmatpush1.xpose.msra.mxu0 0.0
    %51 = vmatprep.subr.mxu0 0.0
    %52 = vmatpush1.xpose.msra.mxu0 0.0
    %53 = vmatprep.subr.mxu0 0.0
    %54 = vmatpush1.xpose.msra.mxu0 0.0
    %55 = vmatprep.subr.mxu0 0.0
    %56 = vmatpush1.xpose.msra.mxu0 0.0
    %57 = vmatprep.subr.mxu0 0.0
    %58 = vmatpush1.xpose.msra.mxu0 0.0
    %59 = vmatprep.subr.mxu0 0.0
    %60 = vmatpush1.xpose.msra.mxu0 %v27
    %61 = vmatprep.subr.mxu0 0.0
    %62 = vmatpush2.xpose.msra.mxu0 0.0
    %63 = vmatprep.subr.mxu0 0.0
    %64 = vmatpush2.xpose.msra.mxu0 0.0
    %65 = vmatprep.subr.mxu0 0.0
    %66 = vmatpush2.xpose.msra.mxu0 0.0
    %67 = vmatprep.subr.mxu0 0.0
    %68 = vmatpush2.xpose.msra.mxu0 0.0
    %69 = vmatprep.subr.mxu0 0.0
    %70 = vmatpush2.xpose.msra.mxu0 0.0
    %71 = vmatprep.subr.mxu0 0.0
    %72 = vmatpush2.xpose.msra.mxu0 0.0
    %73 = vmatprep.subr.mxu0 0.0
    %74 = vmatpush2.xpose.msra.mxu0 0.0
    %75 = vmatprep.subr.mxu0 0.0
    %76 = vmatpush2.xpose.msra.mxu0 0.0
    %77 = vmatprep.subr.mxu0 0.0
    %78 = vmatpush2.xpose.msra.mxu0 0.0
    %79 = vmatprep.subr.mxu0 0.0
    %80 = vmatpush2.xpose.msra.mxu0 0.0
    %81 = vmatprep.subr.mxu0 0.0
    %82 = vmatpush2.xpose.msra.mxu0 0.0
    %83 = vmatprep.subr.mxu0 0.0
    %84 = vmatpush2.xpose.msra.mxu0 0.0
    %85 = vmatprep.subr.mxu0 0.0
    %86 = vmatpush2.xpose.msra.mxu0 0.0
    %87 = vmatprep.subr.mxu0 0.0
    %88 = vmatpush2.xpose.msra.mxu0 0.0
    %89 = vmatprep.subr.mxu0 0.0
    %90 = vmatpush2.xpose.msra.mxu0 0.0
    %91 = vmatprep.subr.mxu0 0.0
    %92 = vmatpush2.xpose.msra.mxu0 0.0
    %93 = vmatprep.mubr.f32.mxu0 0.0
    %94 = vmatmul.mubr.f32.gmra.mxu0 %v27
    %v95 = vpop.f32.mrf.mxu0
    %v96 = vadd.f32 0.0, %v95
    %v97 = vpop.f32.mrf.mxu0
    %98 = vdwg.mxu0
    %v99 = vadd.f32 %v28, %v96
    %vm100 = vcmask 64512
    %101 = vst.msk [vmem:[#allocation2] sm:$0xff] %vm100, %v99
    // Predicated region
    $region14: #{tpu_custom_call.1} parent=1 // pred_check
      %p102 = pneg %p21
    $region15: #{tpu_custom_call.1} parent=1 // pred_check_branch
      %104 = sbr.rel (%p102) target = $region17
    $region16: #{tpu_custom_call.1} parent=1 // pred_region
      %v105 = vld [vmem:[#allocation2] sm:$0xff]
      %v106 = vlaneseq
      %v107 = vshrl.u32 %v106, 7
      %v108 = vlaneseq
      %v109 = vand.u32 %v108, 127
      %vm110 = vcmp.eq.s32.totalorder %v107, %v109
      %v111 = vsel %vm110, %v105, 0.0
      %v112 = vsel %vm100, %v111, 0.0
      %113 = vadd.xlane.f32.xlu0 %v112
      %v114 = vpop.xlane.xlu0 %113
      %v115 = vrot.slane %v112, 4
      %v116 = vadd.f32 %v112, %v115
      %v117 = vrot.slane %v116, 2
      %v118 = vadd.f32 %v116, %v117
      %v119 = vrot.slane %v118, 1
      %v120 = vadd.f32 %v118, %v119
      %v121 = vmul.f32 %v114, %v120
      %v122 = vmax.f32 %v121, 1e-16
      %v123 = vrsqrt.pop %v122
      %v124 = vmul.f32 %v105, %v123
      %vm125 = vcmp.ne.s32.totalorder %v107, %v109
      %vm126 = vcmp.lt.s32.totalorder %v107, 5
      %vm127 = vmand %vm125, %vm126
      %vm128 = vcmp.lt.s32.totalorder %v109, 5
      %vm129 = vmand %vm127, %vm128
      %v130 = vadd.f32 %v124, 1.0
      %v131 = vsel %vm129, %v130, 0.0
      %v132 = vsel %vm100, %v131, 0.0
      %133 = vadd.xlane.f32.xlu0 %v132
      %v134 = vpop.xlane.xlu0 %133
      %v135 = vrot.slane %v134, 4
      %v136 = vadd.f32 %v134, %v135
      %v137 = vrot.slane %v136, 2
      %v138 = vadd.f32 %v136, %v137
      %v139 = vrot.slane %v138, 1
      %v140 = vadd.f32 %v138, %v139
      %s141 = vtos %v140
      %s142 = smul.f32 %s141, 0.025
      %s143 = scalar_lea.smem [#allocation6], 0
      %144 = sst [smem:[%s143]] %s142
    $region17: #{tpu_custom_call.1} parent=1 // pred_fallthru
      _
    // Predicated region
    $region18: #{tpu_custom_call.1} parent=1 // pred_check
      _
    $region19: #{tpu_custom_call.1} parent=1 // pred_check_branch
      %146 = sbr.rel (0) target = $region21
    $region20: #{tpu_custom_call.1} parent=1 // pred_region
      %s148 = ssub.s32 16, 16
      %149 = vsyncadd [#allocation5], %s148
      %152 = dma.smem_to_hbm [#allocation6], 16, %s1, [#allocation5]
    $region21: #{tpu_custom_call.1} parent=1 // pred_fallthru
      _
    // Predicated region
    $region22: #{tpu_custom_call.1} parent=1 // pred_check
      _
    $region23: #{tpu_custom_call.1} parent=1 // pred_check_branch
      %154 = sbr.rel (0) target = $region25
    $region24: #{tpu_custom_call.1} parent=1 // pred_region
      %155 = dma.done [#allocation5], 16
    $region25: #{tpu_custom_call.1} parent=1 // pred_fallthru
      _
    %156 = sfence
    %157 = vsyncpa [#allocation4], 1
    %158 = vsyncpa [#allocation5], 1

</llo_original>
